<compile_context>
chip_gen: v6e
topology: v6e:2x2x1
jax: 0.10.0
libtpu: 0.0.40
codegen_flags: <defaults>
</compile_context>

<pallas_src>
import functools

import jax
import jax.numpy as jnp
from jax.experimental import pallas as pl
from jax.experimental.pallas import tpu as pltpu

INPUT_DIM = 8
FEATURE_DIM = 128
HIDDEN_DIMS = [64, 128, 256, 128]
BN_EPS = 1e-5
L2_EPS = 1e-12
_N_HIDDEN = len(HIDDEN_DIMS)


def _cdiv(a, b):
    return -(-a // b)


def _round_up(n, m):
    return _cdiv(n, m) * m


# -----------------------------------------------------------------------------
# Kernel
# -----------------------------------------------------------------------------
def _mlp_kernel(*refs):
    """refs = (x, [W, b] * 4 hidden layers, W_out, b_out, out).

    W are [in, out] with the eval-mode BatchNorm affine folded in.  Layer 1's W is
    f32 (computed on the VPU); later W are bf16 (MXU).  b are [1, out] f32.  All
    accumulation / bias add / ReLU / normalize runs in f32.
    """
    x_ref = refs[0]
    o_ref = refs[-1]
    p = refs[1:-1]

    # --- layer 1 on the VPU: z = x @ W1 + b1 as K broadcast-FMAs, all f32 ------
    x = x_ref[...]                          # [TB, K] f32
    w1 = p[0][...]                          # [K, H1p] f32
    b1 = p[1][...]                          # [1, H1p] f32
    k_in = x.shape[1]
    z = b1 + x[:, 0:1] * w1[0:1, :]
    for k in range(1, k_in):
        z = z + x[:, k:k + 1] * w1[k:k + 1, :]
    h = jnp.maximum(z, 0.0).astype(jnp.bfloat16)

    # --- layers 2..N_HIDDEN on the MXU (bf16 x bf16 -> f32 accumulate) ---------
    for i in range(1, _N_HIDDEN):
        w_ref, b_ref = p[2 * i], p[2 * i + 1]
        zi = jnp.dot(h, w_ref[...], preferred_element_type=jnp.float32) + b_ref[...]
        h = jnp.maximum(zi, 0.0).astype(jnp.bfloat16)

    # --- final linear + L2 normalize -------------------------------------------
    w_ref, b_ref = p[2 * _N_HIDDEN], p[2 * _N_HIDDEN + 1]
    f = jnp.dot(h, w_ref[...], preferred_element_type=jnp.float32) + b_ref[...]

    # F.normalize(p=2, dim=1): f / max(||f||, eps) == f * rsqrt(max(||f||^2, eps^2))
    ss = jnp.sum(f * f, axis=1, keepdims=True)
    inv = jax.lax.rsqrt(jnp.maximum(ss, L2_EPS * L2_EPS))
    o_ref[...] = (f * inv).astype(o_ref.dtype)


# -----------------------------------------------------------------------------
# Wrapper
# -----------------------------------------------------------------------------
def _choose_tile(B, block_b):
    """Pick (TB, padded_B): TB multiple of 16, at most block_b rows, and when
    B > 128 small enough that the grid has >= 2 steps (keeps both v7x TCs fed)."""
    Bp = _round_up(max(B, 16), 16)
    if Bp <= 128:
        return Bp, Bp
    tb = min(block_b, _round_up(_cdiv(Bp, 2), 16))
    Bp = _round_up(Bp, tb)
    return tb, Bp


@functools.partial(jax.jit, static_argnames=("block_b",))
def radar_feature_extractor(x, params, block_b=512):
    """x: [B, INPUT_DIM] f32.  params: folded (W[in,out], b[1,out] f32) * 5, with
    the first W in f32 and subsequent W in bf16."""
    B, d_in = x.shape
    TB, Bp = _choose_tile(B, block_b)
    if Bp != B:
        x = jnp.pad(x, ((0, Bp - B), (0, 0)))

    # x / out are tiled over the batch grid axis; weights & biases use constant
    # index maps so they are DMA'd once and stay VMEM-resident across all steps.
    in_specs = [pl.BlockSpec((TB, d_in), lambda i: (i, 0))]
    for a in params:
        in_specs.append(pl.BlockSpec(a.shape, lambda i: (0, 0)))

    out = pl.pallas_call(
        _mlp_kernel,
        out_shape=jax.ShapeDtypeStruct((Bp, FEATURE_DIM), jnp.float32),
        grid=(Bp // TB,),
        in_specs=in_specs,
        out_specs=pl.BlockSpec((TB, FEATURE_DIM), lambda i: (i, 0)),
        compiler_params=pltpu.CompilerParams(
            dimension_semantics=("parallel",),   # shard batch tiles across v7x's 2 TCs
        ),
    )(x, *params)
    return out[:B]


# -----------------------------------------------------------------------------
# Parameter construction (synthetic, PyTorch layout) + BN folding
# -----------------------------------------------------------------------------
def init_raw_params(key):
    """Synthetic params in PyTorch layout:
    hidden layer i -> (W [out,in], b, gamma, beta, running_mean, running_var);
    final -> (W [out,in], b)."""
    dims = [INPUT_DIM] + HIDDEN_DIMS
    hidden = []
    for i in range(_N_HIDDEN):
        d_in, d_out = dims[i], dims[i + 1]
        key, kw, kb, kg, kbe, km, kv = jax.random.split(key, 7)
        w = jax.random.normal(kw, (d_out, d_in), jnp.float32) / jnp.sqrt(float(d_in))
        b = 0.05 * jax.random.normal(kb, (d_out,), jnp.float32)
        gamma = 1.0 + 0.1 * jax.random.normal(kg, (d_out,), jnp.float32)
        beta = 0.1 * jax.random.normal(kbe, (d_out,), jnp.float32)
        mean = 0.1 * jax.random.normal(km, (d_out,), jnp.float32)
        var = 1.0 + 0.1 * jax.random.uniform(kv, (d_out,), jnp.float32)
        hidden.append((w, b, gamma, beta, mean, var))
    key, kw, kb = jax.random.split(key, 3)
    w = jax.random.normal(kw, (FEATURE_DIM, HIDDEN_DIMS[-1]), jnp.float32) / jnp.sqrt(
        float(HIDDEN_DIMS[-1]))
    b = 0.05 * jax.random.normal(kb, (FEATURE_DIM,), jnp.float32)
    return {"hidden": hidden, "final": (w, b)}


def fold_params(raw, weight_dtype=jnp.bfloat16):
    """Fold eval-mode BatchNorm into the Linear params, transpose W to [in,out],
    zero-pad every hidden width to a multiple of 128 lanes (exact same math).
    Layer-1 W stays f32 (it runs on the VPU); later W cast to `weight_dtype`;
    biases stay f32 (added to the f32 accumulator)."""
    folded = []
    prev_pad = 0
    for li, (w, b, gamma, beta, mean, var) in enumerate(raw["hidden"]):
        scale = gamma / jnp.sqrt(var + BN_EPS)            # [out]
        wt = w.T * scale[None, :]                         # [in, out]
        bf = b * scale + (beta - mean * scale)            # [out]
        if prev_pad:                                      # zero rows for padded inputs
            wt = jnp.pad(wt, ((0, prev_pad), (0, 0)))
        out_pad = (-wt.shape[1]) % 128                    # pad out-dim to 128 lanes
        if out_pad:
            wt = jnp.pad(wt, ((0, 0), (0, out_pad)))
            bf = jnp.pad(bf, (0, out_pad))
        prev_pad = out_pad
        wdt = jnp.float32 if li == 0 else weight_dtype    # layer 1 runs on the VPU
        folded += [wt.astype(wdt), bf.reshape(1, -1).astype(jnp.float32)]
    w, b = raw["final"]
    wt = w.T
    if prev_pad:
        wt = jnp.pad(wt, ((0, prev_pad), (0, 0)))
    folded += [wt.astype(weight_dtype), b.reshape(1, -1).astype(jnp.float32)]
    return tuple(folded)


# -----------------------------------------------------------------------------
# References
# -----------------------------------------------------------------------------
def _reference_folded(x, folded):
    """Plain-JAX mirror of the kernel math (same fold, padding, dtypes and
    layer-1 FMA accumulation order)."""
    w1, b1 = folded[0], folded[1]
    z = b1 + x[:, 0:1] * w1[0:1, :]
    for k in range(1, x.shape[1]):
        z = z + x[:, k:k + 1] * w1[k:k + 1, :]
    act_dtype = folded[2].dtype
    h = jnp.maximum(z, 0.0).astype(act_dtype)
    for i in range(1, _N_HIDDEN):
        w, b = folded[2 * i], folded[2 * i + 1]
        zi = jnp.dot(h, w, preferred_element_type=jnp.float32) + b
        h = jnp.maximum(zi, 0.0).astype(act_dtype)
    w, b = folded[-2], folded[-1]
    f = jnp.dot(h, w, preferred_element_type=jnp.float32) + b
    ss = jnp.sum(f * f, axis=1, keepdims=True)
    return f * jax.lax.rsqrt(jnp.maximum(ss, L2_EPS * L2_EPS))


def _reference_torch(x, raw):
    """Eval-mode PyTorch semantics in f32 (Linear -> BN(running stats) -> ReLU;
    Dropout = identity), unfolded and unpadded."""
    h = x.astype(jnp.float32)
    for (w, b, gamma, beta, mean, var) in raw["hidden"]:
        z = h @ w.T + b
        z = (z - mean) / jnp.sqrt(var + BN_EPS) * gamma + beta
        h = jnp.maximum(z, 0.0)
    w, b = raw["final"]
    f = h @ w.T + b
    n = jnp.sqrt(jnp.sum(f * f, axis=1, keepdims=True))
    return f / jnp.maximum(n, L2_EPS)


# -----------------------------------------------------------------------------
# Self-test
# -----------------------------------------------------------------------------
if __name__ == "__main__":
    key = jax.random.PRNGKey(0)
    k_x, k_x2, k_p = jax.random.split(key, 3)

    raw = init_raw_params(k_p)
    params_bf16 = fold_params(raw, jnp.bfloat16)   # what the kernel consumes
    params_f32 = fold_params(raw, jnp.float32)     # for fold-correctness check

    batch = 16
    x = jax.random.normal(k_x, (batch, INPUT_DIM), jnp.float32)

    # 1) The BN fold + lane padding + layer-1 FMA form is exact (pure f32).
    ref_fold = _reference_folded(x, params_f32)
    ref_torch = _reference_torch(x, raw)
    assert jnp.allclose(ref_fold, ref_torch, atol=1e-4, rtol=1e-4)

    # 2) Kernel vs. a JAX mirror of the same (bf16-weight, f32-accumulate) math.
    out = jax.block_until_ready(radar_feature_extractor(x, params_bf16))
    assert out.shape == (batch, FEATURE_DIM)
    assert jnp.allclose(out, _reference_folded(x, params_bf16), atol=1e-3, rtol=1e-3)

    # 3) Kernel vs. the f32 PyTorch-semantics reference (bf16 path, loose tol).
    assert jnp.allclose(out, ref_torch, atol=5e-2)

    # 4) Rows are unit-norm.
    assert jnp.allclose(jnp.linalg.norm(out, axis=1), 1.0, atol=1e-3)

    # 5) Exercise the multi-step grid + batch padding path (300 -> 2 tiles of 160).
    x2 = jax.random.normal(k_x2, (300, INPUT_DIM), jnp.float32)
    out2 = jax.block_until_ready(radar_feature_extractor(x2, params_bf16))
    assert out2.shape == (300, FEATURE_DIM)
    assert jnp.allclose(out2, _reference_folded(x2, params_bf16), atol=1e-3, rtol=1e-3)

    print("KERNEL_OK")
</pallas_src>

<mosaic_0001>
module attributes {stable_mosaic.version = 11 : i64} {
  func.func @_mlp_kernel(%arg0: i32, %arg1: memref<16x8xf32, #tpu.memory_space<vmem>>, %arg2: memref<8x128xf32, #tpu.memory_space<vmem>>, %arg3: memref<1x128xf32, #tpu.memory_space<vmem>>, %arg4: memref<128x128xbf16, #tpu.memory_space<vmem>>, %arg5: memref<1x128xf32, #tpu.memory_space<vmem>>, %arg6: memref<128x256xbf16, #tpu.memory_space<vmem>>, %arg7: memref<1x256xf32, #tpu.memory_space<vmem>>, %arg8: memref<256x128xbf16, #tpu.memory_space<vmem>>, %arg9: memref<1x128xf32, #tpu.memory_space<vmem>>, %arg10: memref<128x128xbf16, #tpu.memory_space<vmem>>, %arg11: memref<1x128xf32, #tpu.memory_space<vmem>>, %arg12: memref<16x128xf32, #tpu.memory_space<vmem>>) attributes {dimension_semantics = [#tpu.dimension_semantics<parallel>], iteration_bounds = array<i64: 1>, scalar_prefetch = 0 : i64, scratch_operands = 0 : i64, tpu.core_type = #tpu.core_type<tc>, window_params = [{transform_indices = @transform_0, window_bounds = array<i64: 16, 8>}, {pipeline_mode = #tpu.pipeline_mode<synchronous>, transform_indices = @transform_1, window_bounds = array<i64: 8, 128>}, {pipeline_mode = #tpu.pipeline_mode<synchronous>, transform_indices = @transform_2, window_bounds = array<i64: 1, 128>}, {pipeline_mode = #tpu.pipeline_mode<synchronous>, transform_indices = @transform_3, window_bounds = array<i64: 128, 128>}, {pipeline_mode = #tpu.pipeline_mode<synchronous>, transform_indices = @transform_4, window_bounds = array<i64: 1, 128>}, {pipeline_mode = #tpu.pipeline_mode<synchronous>, transform_indices = @transform_5, window_bounds = array<i64: 128, 256>}, {pipeline_mode = #tpu.pipeline_mode<synchronous>, transform_indices = @transform_6, window_bounds = array<i64: 1, 256>}, {pipeline_mode = #tpu.pipeline_mode<synchronous>, transform_indices = @transform_7, window_bounds = array<i64: 256, 128>}, {pipeline_mode = #tpu.pipeline_mode<synchronous>, transform_indices = @transform_8, window_bounds = array<i64: 1, 128>}, {pipeline_mode = #tpu.pipeline_mode<synchronous>, transform_indices = @transform_9, window_bounds = array<i64: 128, 128>}, {pipeline_mode = #tpu.pipeline_mode<synchronous>, transform_indices = @transform_10, window_bounds = array<i64: 1, 128>}, {transform_indices = @transform_11, window_bounds = array<i64: 16, 128>}]} {
    %c0 = arith.constant 0 : index
    %c0_0 = arith.constant 0 : index
    %0 = vector.load %arg1[%c0, %c0_0] : memref<16x8xf32, #tpu.memory_space<vmem>>, vector<16x8xf32>
    %c0_1 = arith.constant 0 : index
    %c0_2 = arith.constant 0 : index
    %1 = vector.load %arg2[%c0_1, %c0_2] : memref<8x128xf32, #tpu.memory_space<vmem>>, vector<8x128xf32>
    %c0_3 = arith.constant 0 : index
    %c0_4 = arith.constant 0 : index
    %2 = vector.load %arg3[%c0_3, %c0_4] : memref<1x128xf32, #tpu.memory_space<vmem>>, vector<1x128xf32>
    %3 = vector.extract_strided_slice %0 {offsets = [0, 0], sizes = [16, 1], strides = [1, 1]} : vector<16x8xf32> to vector<16x1xf32>
    %4 = vector.extract_strided_slice %1 {offsets = [0, 0], sizes = [1, 128], strides = [1, 1]} : vector<8x128xf32> to vector<1x128xf32>
    %5 = vector.broadcast %3 : vector<16x1xf32> to vector<16x128xf32>
    %6 = vector.broadcast %4 : vector<1x128xf32> to vector<16x128xf32>
    %7 = arith.mulf %5, %6 : vector<16x128xf32>
    %8 = vector.broadcast %2 : vector<1x128xf32> to vector<16x128xf32>
    %9 = arith.addf %8, %7 : vector<16x128xf32>
    %10 = vector.extract_strided_slice %0 {offsets = [0, 1], sizes = [16, 1], strides = [1, 1]} : vector<16x8xf32> to vector<16x1xf32>
    %11 = vector.extract_strided_slice %1 {offsets = [1, 0], sizes = [1, 128], strides = [1, 1]} : vector<8x128xf32> to vector<1x128xf32>
    %12 = vector.broadcast %10 : vector<16x1xf32> to vector<16x128xf32>
    %13 = vector.broadcast %11 : vector<1x128xf32> to vector<16x128xf32>
    %14 = arith.mulf %12, %13 : vector<16x128xf32>
    %15 = arith.addf %9, %14 : vector<16x128xf32>
    %16 = vector.extract_strided_slice %0 {offsets = [0, 2], sizes = [16, 1], strides = [1, 1]} : vector<16x8xf32> to vector<16x1xf32>
    %17 = vector.extract_strided_slice %1 {offsets = [2, 0], sizes = [1, 128], strides = [1, 1]} : vector<8x128xf32> to vector<1x128xf32>
    %18 = vector.broadcast %16 : vector<16x1xf32> to vector<16x128xf32>
    %19 = vector.broadcast %17 : vector<1x128xf32> to vector<16x128xf32>
    %20 = arith.mulf %18, %19 : vector<16x128xf32>
    %21 = arith.addf %15, %20 : vector<16x128xf32>
    %22 = vector.extract_strided_slice %0 {offsets = [0, 3], sizes = [16, 1], strides = [1, 1]} : vector<16x8xf32> to vector<16x1xf32>
    %23 = vector.extract_strided_slice %1 {offsets = [3, 0], sizes = [1, 128], strides = [1, 1]} : vector<8x128xf32> to vector<1x128xf32>
    %24 = vector.broadcast %22 : vector<16x1xf32> to vector<16x128xf32>
    %25 = vector.broadcast %23 : vector<1x128xf32> to vector<16x128xf32>
    %26 = arith.mulf %24, %25 : vector<16x128xf32>
    %27 = arith.addf %21, %26 : vector<16x128xf32>
    %28 = vector.extract_strided_slice %0 {offsets = [0, 4], sizes = [16, 1], strides = [1, 1]} : vector<16x8xf32> to vector<16x1xf32>
    %29 = vector.extract_strided_slice %1 {offsets = [4, 0], sizes = [1, 128], strides = [1, 1]} : vector<8x128xf32> to vector<1x128xf32>
    %30 = vector.broadcast %28 : vector<16x1xf32> to vector<16x128xf32>
    %31 = vector.broadcast %29 : vector<1x128xf32> to vector<16x128xf32>
    %32 = arith.mulf %30, %31 : vector<16x128xf32>
    %33 = arith.addf %27, %32 : vector<16x128xf32>
    %34 = vector.extract_strided_slice %0 {offsets = [0, 5], sizes = [16, 1], strides = [1, 1]} : vector<16x8xf32> to vector<16x1xf32>
    %35 = vector.extract_strided_slice %1 {offsets = [5, 0], sizes = [1, 128], strides = [1, 1]} : vector<8x128xf32> to vector<1x128xf32>
    %36 = vector.broadcast %34 : vector<16x1xf32> to vector<16x128xf32>
    %37 = vector.broadcast %35 : vector<1x128xf32> to vector<16x128xf32>
    %38 = arith.mulf %36, %37 : vector<16x128xf32>
    %39 = arith.addf %33, %38 : vector<16x128xf32>
    %40 = vector.extract_strided_slice %0 {offsets = [0, 6], sizes = [16, 1], strides = [1, 1]} : vector<16x8xf32> to vector<16x1xf32>
    %41 = vector.extract_strided_slice %1 {offsets = [6, 0], sizes = [1, 128], strides = [1, 1]} : vector<8x128xf32> to vector<1x128xf32>
    %42 = vector.broadcast %40 : vector<16x1xf32> to vector<16x128xf32>
    %43 = vector.broadcast %41 : vector<1x128xf32> to vector<16x128xf32>
    %44 = arith.mulf %42, %43 : vector<16x128xf32>
    %45 = arith.addf %39, %44 : vector<16x128xf32>
    %46 = vector.extract_strided_slice %0 {offsets = [0, 7], sizes = [16, 1], strides = [1, 1]} : vector<16x8xf32> to vector<16x1xf32>
    %47 = vector.extract_strided_slice %1 {offsets = [7, 0], sizes = [1, 128], strides = [1, 1]} : vector<8x128xf32> to vector<1x128xf32>
    %48 = vector.broadcast %46 : vector<16x1xf32> to vector<16x128xf32>
    %49 = vector.broadcast %47 : vector<1x128xf32> to vector<16x128xf32>
    %50 = arith.mulf %48, %49 : vector<16x128xf32>
    %51 = arith.addf %45, %50 : vector<16x128xf32>
    %cst = arith.constant 0.000000e+00 : f32
    %52 = vector.broadcast %cst : f32 to vector<16x128xf32>
    %53 = arith.maximumf %51, %52 : vector<16x128xf32>
    %54 = arith.truncf %53 : vector<16x128xf32> to vector<16x128xbf16>
    %c0_5 = arith.constant 0 : index
    %c0_6 = arith.constant 0 : index
    %55 = vector.load %arg4[%c0_5, %c0_6] : memref<128x128xbf16, #tpu.memory_space<vmem>>, vector<128x128xbf16>
    %cst_7 = arith.constant dense<0.000000e+00> : vector<16x128xf32>
    %56 = tpu.matmul %54, %55, %cst_7 {dimension_numbers = #tpu.dot_dimension_numbers<[1], [0], [0], [1], [0, 0, 1, 1], [], []>} : vector<16x128xbf16>, vector<128x128xbf16>, vector<16x128xf32> -> vector<16x128xf32>
    %c0_8 = arith.constant 0 : index
    %c0_9 = arith.constant 0 : index
    %57 = vector.load %arg5[%c0_8, %c0_9] : memref<1x128xf32, #tpu.memory_space<vmem>>, vector<1x128xf32>
    %58 = vector.broadcast %57 : vector<1x128xf32> to vector<16x128xf32>
    %59 = arith.addf %56, %58 : vector<16x128xf32>
    %cst_10 = arith.constant 0.000000e+00 : f32
    %60 = vector.broadcast %cst_10 : f32 to vector<16x128xf32>
    %61 = arith.maximumf %59, %60 : vector<16x128xf32>
    %62 = arith.truncf %61 : vector<16x128xf32> to vector<16x128xbf16>
    %c0_11 = arith.constant 0 : index
    %c0_12 = arith.constant 0 : index
    %63 = vector.load %arg6[%c0_11, %c0_12] : memref<128x256xbf16, #tpu.memory_space<vmem>>, vector<128x256xbf16>
    %cst_13 = arith.constant dense<0.000000e+00> : vector<16x256xf32>
    %64 = tpu.matmul %62, %63, %cst_13 {dimension_numbers = #tpu.dot_dimension_numbers<[1], [0], [0], [1], [0, 0, 1, 1], [], []>} : vector<16x128xbf16>, vector<128x256xbf16>, vector<16x256xf32> -> vector<16x256xf32>
    %c0_14 = arith.constant 0 : index
    %c0_15 = arith.constant 0 : index
    %65 = vector.load %arg7[%c0_14, %c0_15] : memref<1x256xf32, #tpu.memory_space<vmem>>, vector<1x256xf32>
    %66 = vector.broadcast %65 : vector<1x256xf32> to vector<16x256xf32>
    %67 = arith.addf %64, %66 : vector<16x256xf32>
    %cst_16 = arith.constant 0.000000e+00 : f32
    %68 = vector.broadcast %cst_16 : f32 to vector<16x256xf32>
    %69 = arith.maximumf %67, %68 : vector<16x256xf32>
    %70 = arith.truncf %69 : vector<16x256xf32> to vector<16x256xbf16>
    %c0_17 = arith.constant 0 : index
    %c0_18 = arith.constant 0 : index
    %71 = vector.load %arg8[%c0_17, %c0_18] : memref<256x128xbf16, #tpu.memory_space<vmem>>, vector<256x128xbf16>
    %cst_19 = arith.constant dense<0.000000e+00> : vector<16x128xf32>
    %72 = tpu.matmul %70, %71, %cst_19 {dimension_numbers = #tpu.dot_dimension_numbers<[1], [0], [0], [1], [0, 0, 1, 1], [], []>} : vector<16x256xbf16>, vector<256x128xbf16>, vector<16x128xf32> -> vector<16x128xf32>
    %c0_20 = arith.constant 0 : index
    %c0_21 = arith.constant 0 : index
    %73 = vector.load %arg9[%c0_20, %c0_21] : memref<1x128xf32, #tpu.memory_space<vmem>>, vector<1x128xf32>
    %74 = vector.broadcast %73 : vector<1x128xf32> to vector<16x128xf32>
    %75 = arith.addf %72, %74 : vector<16x128xf32>
    %cst_22 = arith.constant 0.000000e+00 : f32
    %76 = vector.broadcast %cst_22 : f32 to vector<16x128xf32>
    %77 = arith.maximumf %75, %76 : vector<16x128xf32>
    %78 = arith.truncf %77 : vector<16x128xf32> to vector<16x128xbf16>
    %c0_23 = arith.constant 0 : index
    %c0_24 = arith.constant 0 : index
    %79 = vector.load %arg10[%c0_23, %c0_24] : memref<128x128xbf16, #tpu.memory_space<vmem>>, vector<128x128xbf16>
    %cst_25 = arith.constant dense<0.000000e+00> : vector<16x128xf32>
    %80 = tpu.matmul %78, %79, %cst_25 {dimension_numbers = #tpu.dot_dimension_numbers<[1], [0], [0], [1], [0, 0, 1, 1], [], []>} : vector<16x128xbf16>, vector<128x128xbf16>, vector<16x128xf32> -> vector<16x128xf32>
    %c0_26 = arith.constant 0 : index
    %c0_27 = arith.constant 0 : index
    %81 = vector.load %arg11[%c0_26, %c0_27] : memref<1x128xf32, #tpu.memory_space<vmem>>, vector<1x128xf32>
    %82 = vector.broadcast %81 : vector<1x128xf32> to vector<16x128xf32>
    %83 = arith.addf %80, %82 : vector<16x128xf32>
    %84 = arith.mulf %83, %83 : vector<16x128xf32>
    %cst_28 = arith.constant dense<0.000000e+00> : vector<16xf32>
    %85 = vector.multi_reduction <add>, %84, %cst_28 [1] : vector<16x128xf32> to vector<16xf32>
    %86 = vector.shape_cast %85 : vector<16xf32> to vector<16x1xf32>
    %cst_29 = arith.constant 1.000000e-24 : f32
    %87 = vector.broadcast %cst_29 : f32 to vector<16x1xf32>
    %88 = arith.maximumf %86, %87 : vector<16x1xf32>
    %89 = math.rsqrt %88 : vector<16x1xf32>
    %90 = vector.broadcast %89 : vector<16x1xf32> to vector<16x128xf32>
    %91 = arith.mulf %83, %90 : vector<16x128xf32>
    %c0_30 = arith.constant 0 : index
    %c0_31 = arith.constant 0 : index
    %92 = vector.load %arg12[%c0_30, %c0_31] : memref<16x128xf32, #tpu.memory_space<vmem>>, vector<16x128xf32>
    tpu.vector_store %arg12[%c0_30, %c0_31], %91 {strides = array<i32>} : memref<16x128xf32, #tpu.memory_space<vmem>>, vector<16x128xf32>,
    return
  }
  func.func @transform_0(%arg0: i32) -> (i32, i32) {
    %c0_i32 = arith.constant 0 : i32
    %c0_i32_0 = arith.constant 0 : i32
    return %arg0, %c0_i32 : i32, i32
  }
  func.func @transform_1(%arg0: i32) -> (i32, i32) {
    %c0_i32 = arith.constant 0 : i32
    %c0_i32_0 = arith.constant 0 : i32
    %c0_i32_1 = arith.constant 0 : i32
    return %c0_i32, %c0_i32_0 : i32, i32
  }
  func.func @transform_2(%arg0: i32) -> (i32, i32) {
    %c0_i32 = arith.constant 0 : i32
    %c0_i32_0 = arith.constant 0 : i32
    %c0_i32_1 = arith.constant 0 : i32
    return %c0_i32, %c0_i32_0 : i32, i32
  }
  func.func @transform_3(%arg0: i32) -> (i32, i32) {
    %c0_i32 = arith.constant 0 : i32
    %c0_i32_0 = arith.constant 0 : i32
    %c0_i32_1 = arith.constant 0 : i32
    return %c0_i32, %c0_i32_0 : i32, i32
  }
  func.func @transform_4(%arg0: i32) -> (i32, i32) {
    %c0_i32 = arith.constant 0 : i32
    %c0_i32_0 = arith.constant 0 : i32
    %c0_i32_1 = arith.constant 0 : i32
    return %c0_i32, %c0_i32_0 : i32, i32
  }
  func.func @transform_5(%arg0: i32) -> (i32, i32) {
    %c0_i32 = arith.constant 0 : i32
    %c0_i32_0 = arith.constant 0 : i32
    %c0_i32_1 = arith.constant 0 : i32
    return %c0_i32, %c0_i32_0 : i32, i32
  }
  func.func @transform_6(%arg0: i32) -> (i32, i32) {
    %c0_i32 = arith.constant 0 : i32
    %c0_i32_0 = arith.constant 0 : i32
    %c0_i32_1 = arith.constant 0 : i32
    return %c0_i32, %c0_i32_0 : i32, i32
  }
  func.func @transform_7(%arg0: i32) -> (i32, i32) {
    %c0_i32 = arith.constant 0 : i32
    %c0_i32_0 = arith.constant 0 : i32
    %c0_i32_1 = arith.constant 0 : i32
    return %c0_i32, %c0_i32_0 : i32, i32
  }
  func.func @transform_8(%arg0: i32) -> (i32, i32) {
    %c0_i32 = arith.constant 0 : i32
    %c0_i32_0 = arith.constant 0 : i32
    %c0_i32_1 = arith.constant 0 : i32
    return %c0_i32, %c0_i32_0 : i32, i32
  }
  func.func @transform_9(%arg0: i32) -> (i32, i32) {
    %c0_i32 = arith.constant 0 : i32
    %c0_i32_0 = arith.constant 0 : i32
    %c0_i32_1 = arith.constant 0 : i32
    return %c0_i32, %c0_i32_0 : i32, i32
  }
  func.func @transform_10(%arg0: i32) -> (i32, i32) {
    %c0_i32 = arith.constant 0 : i32
    %c0_i32_0 = arith.constant 0 : i32
    %c0_i32_1 = arith.constant 0 : i32
    return %c0_i32, %c0_i32_0 : i32, i32
  }
  func.func @transform_11(%arg0: i32) -> (i32, i32) {
    %c0_i32 = arith.constant 0 : i32
    %c0_i32_0 = arith.constant 0 : i32
    return %arg0, %c0_i32 : i32, i32
  }
}

</mosaic_0001>

<llo_original>
// kernel: radar_feature_extractor.1
$region0: #{radar_feature_extractor.1}
  #allocation0 [shape = 'u32[]', space=smem, size = 0x4, offset = 0x4, fixed_abs, tag = 'smem constant byte address 0x4 - core index']
  #allocation1 [shape = 'u32[144,128]{1,0:T(1,128)}', space=vmem, size = 0x12000, scoped, tag = 'internal scratch']
  %s0 = inlined_call_operand.vmem [shape: f32[16,8], index: 0, kind: input, shape index: {}]
  %s1 = inlined_call_operand.vmem [shape: f32[8,128], index: 1, kind: input, shape index: {}]
  %s2 = inlined_call_operand.vmem [shape: f32[1,128], index: 2, kind: input, shape index: {}]
  %s3 = inlined_call_operand.hbm [shape: bf16[128,128], index: 3, kind: input, shape index: {}]
  %s4 = inlined_call_operand.vmem [shape: f32[1,128], index: 4, kind: input, shape index: {}]
  %s5 = inlined_call_operand.hbm [shape: bf16[128,256], index: 5, kind: input, shape index: {}]
  %s6 = inlined_call_operand.vmem [shape: f32[1,256], index: 6, kind: input, shape index: {}]
  %s7 = inlined_call_operand.hbm [shape: bf16[256,128], index: 7, kind: input, shape index: {}]
  %s8 = inlined_call_operand.vmem [shape: f32[1,128], index: 8, kind: input, shape index: {}]
  %s9 = inlined_call_operand.hbm [shape: bf16[128,128], index: 9, kind: input, shape index: {}]
  %s10 = inlined_call_operand.vmem [shape: f32[1,128], index: 10, kind: input, shape index: {}]
  %s11 = inlined_call_operand.hbm [shape: f32[16,128], index: 11, kind: output, shape index: {}]
  %s12 = sld [smem:[#allocation0]]
  $region70: #{radar_feature_extractor.1} parent=0
    _
  %s14 = ssub.s32 1, %s12
  %s15 = scalar_select 0, %s14, %s12
  $region1: #{radar_feature_extractor.1} parent=0
    #allocation2 [shape = 'u8[32768]{0}', space=vmem, size = 0x8000, scoped, tag = 'input window, operand 3, single buffered']
    #allocation3 [shape = 's32[1]{0}', space=sflag, size = 0x4, scoped, tag = 'scoped memory for radar_feature_extractor.1']
    #allocation4 [shape = 's32[1]{0}', space=sflag, size = 0x4, scoped, tag = 'scoped memory for radar_feature_extractor.1']
    #allocation5 [shape = 'u8[65536]{0}', space=vmem, size = 0x10000, scoped, tag = 'input window, operand 5, single buffered']
    #allocation6 [shape = 's32[1]{0}', space=sflag, size = 0x4, scoped, tag = 'scoped memory for radar_feature_extractor.1']
    #allocation7 [shape = 'u8[65536]{0}', space=vmem, size = 0x10000, scoped, tag = 'input window, operand 7, single buffered']
    #allocation8 [shape = 'u8[32768]{0}', space=vmem, size = 0x8000, scoped, tag = 'input window, operand 9, single buffered']
    #allocation9 [shape = 's32[1]{0}', space=sflag, size = 0x4, scoped, tag = 'scoped memory for radar_feature_extractor.1']
    #allocation10 [shape = 'u8[8192]{0}', space=vmem, size = 0x2000, scoped, tag = 'output window, operand 0, single buffered']
    %16 = vsyncpa [#allocation3], 0
    %17 = vsyncpa [#allocation6], 0
    %18 = vsyncpa [#allocation9], 0
    %19 = vsyncpa [#allocation4], 0
    // Predicated region
    $region2: #{radar_feature_extractor.1} parent=1 // pred_check
      _
    $region3: #{radar_feature_extractor.1} parent=1 // pred_check_branch
      %21 = sbr.rel (0) target = $region5
    $region4: #{radar_feature_extractor.1} parent=1 // pred_region
      _
    $region5: #{radar_feature_extractor.1} parent=1 // pred_fallthru
      _
    // Predicated region
    $region6: #{radar_feature_extractor.1} parent=1 // pred_check
      _
    $region7: #{radar_feature_extractor.1} parent=1 // pred_check_branch
      %23 = sbr.rel (0) target = $region9
    $region8: #{radar_feature_extractor.1} parent=1 // pred_region
      _
    $region9: #{radar_feature_extractor.1} parent=1 // pred_fallthru
      _
    // Predicated region
    $region10: #{radar_feature_extractor.1} parent=1 // pred_check
      _
    $region11: #{radar_feature_extractor.1} parent=1 // pred_check_branch
      %25 = sbr.rel (0) target = $region13
    $region12: #{radar_feature_extractor.1} parent=1 // pred_region
      _
    $region13: #{radar_feature_extractor.1} parent=1 // pred_fallthru
      _
    // Predicated region
    $region14: #{radar_feature_extractor.1} parent=1 // pred_check
      _
    $region15: #{radar_feature_extractor.1} parent=1 // pred_check_branch
      %27 = sbr.rel (0) target = $region17
    $region16: #{radar_feature_extractor.1} parent=1 // pred_region
      %s29 = ssub.s32 1024, 1024
      %30 = vsyncadd [#allocation3], %s29
      %s31 = sshll.u32 [#allocation2], 4
      %s32 = int_to_ptr.vmem [resolvable:$true] %s31
      %37 = dma.hbm_to_vmem [thread:$0]  %s3, 1024, %s32, [#allocation3], 64, 64, 4
    $region17: #{radar_feature_extractor.1} parent=1 // pred_fallthru
      _
    // Predicated region
    $region18: #{radar_feature_extractor.1} parent=1 // pred_check
      _
    $region19: #{radar_feature_extractor.1} parent=1 // pred_check_branch
      %39 = sbr.rel (0) target = $region21
    $region20: #{radar_feature_extractor.1} parent=1 // pred_region
      _
    $region21: #{radar_feature_extractor.1} parent=1 // pred_fallthru
      _
    // Predicated region
    $region22: #{radar_feature_extractor.1} parent=1 // pred_check
      _
    $region23: #{radar_feature_extractor.1} parent=1 // pred_check_branch
      %41 = sbr.rel (0) target = $region25
    $region24: #{radar_feature_extractor.1} parent=1 // pred_region
      %s43 = ssub.s32 2048, 2048
      %44 = vsyncadd [#allocation6], %s43
      %s45 = sshll.u32 [#allocation5], 4
      %s46 = int_to_ptr.vmem [resolvable:$true] %s45
      %51 = dma.hbm_to_vmem [thread:$0]  %s5, 2048, %s46, [#allocation6], 128, 128, 8
    $region25: #{radar_feature_extractor.1} parent=1 // pred_fallthru
      _
    // Predicated region
    $region26: #{radar_feature_extractor.1} parent=1 // pred_check
      _
    $region27: #{radar_feature_extractor.1} parent=1 // pred_check_branch
      %53 = sbr.rel (0) target = $region29
    $region28: #{radar_feature_extractor.1} parent=1 // pred_region
      _
    $region29: #{radar_feature_extractor.1} parent=1 // pred_fallthru
      _
    // Predicated region
    $region30: #{radar_feature_extractor.1} parent=1 // pred_check
      _
    $region31: #{radar_feature_extractor.1} parent=1 // pred_check_branch
      %55 = sbr.rel (0) target = $region33
    $region32: #{radar_feature_extractor.1} parent=1 // pred_region
      %s57 = ssub.s32 2048, 2048
      %58 = vsyncadd [#allocation6], %s57
      %s59 = sshll.u32 [#allocation7], 4
      %s60 = int_to_ptr.vmem [resolvable:$true] %s59
      %65 = dma.hbm_to_vmem [thread:$0]  %s7, 2048, %s60, [#allocation6], 64, 64, 4
    $region33: #{radar_feature_extractor.1} parent=1 // pred_fallthru
      _
    // Predicated region
    $region34: #{radar_feature_extractor.1} parent=1 // pred_check
      _
    $region35: #{radar_feature_extractor.1} parent=1 // pred_check_branch
      %67 = sbr.rel (0) target = $region37
    $region36: #{radar_feature_extractor.1} parent=1 // pred_region
      _
    $region37: #{radar_feature_extractor.1} parent=1 // pred_fallthru
      _
    // Predicated region
    $region38: #{radar_feature_extractor.1} parent=1 // pred_check
      _
    $region39: #{radar_feature_extractor.1} parent=1 // pred_check_branch
      %69 = sbr.rel (0) target = $region41
    $region40: #{radar_feature_extractor.1} parent=1 // pred_region
      %s71 = ssub.s32 1024, 1024
      %72 = vsyncadd [#allocation9], %s71
      %s73 = sshll.u32 [#allocation8], 4
      %s74 = int_to_ptr.vmem [resolvable:$true] %s73
      %79 = dma.hbm_to_vmem [thread:$0]  %s9, 1024, %s74, [#allocation9], 64, 64, 4
    $region41: #{radar_feature_extractor.1} parent=1 // pred_fallthru
      _
    // Predicated region
    $region42: #{radar_feature_extractor.1} parent=1 // pred_check
      _
    $region43: #{radar_feature_extractor.1} parent=1 // pred_check_branch
      %81 = sbr.rel (0) target = $region45
    $region44: #{radar_feature_extractor.1} parent=1 // pred_region
      _
    $region45: #{radar_feature_extractor.1} parent=1 // pred_fallthru
      _
    // Predicated region
    $region46: #{radar_feature_extractor.1} parent=1 // pred_check
      _
    $region47: #{radar_feature_extractor.1} parent=1 // pred_check_branch
      %83 = sbr.rel (0) target = $region49
    $region48: #{radar_feature_extractor.1} parent=1 // pred_region
      %84 = dma.done [#allocation3], 1024
    $region49: #{radar_feature_extractor.1} parent=1 // pred_fallthru
      _
    // Predicated region
    $region50: #{radar_feature_extractor.1} parent=1 // pred_check
      _
    $region51: #{radar_feature_extractor.1} parent=1 // pred_check_branch
      %86 = sbr.rel (0) target = $region53
    $region52: #{radar_feature_extractor.1} parent=1 // pred_region
      %87 = dma.done [#allocation6], 2048
    $region53: #{radar_feature_extractor.1} parent=1 // pred_fallthru
      _
    // Predicated region
    $region54: #{radar_feature_extractor.1} parent=1 // pred_check
      _
    $region55: #{radar_feature_extractor.1} parent=1 // pred_check_branch
      %89 = sbr.rel (0) target = $region57
    $region56: #{radar_feature_extractor.1} parent=1 // pred_region
      %90 = dma.done [#allocation6], 2048
    $region57: #{radar_feature_extractor.1} parent=1 // pred_fallthru
      _
    // Predicated region
    $region58: #{radar_feature_extractor.1} parent=1 // pred_check
      _
    $region59: #{radar_feature_extractor.1} parent=1 // pred_check_branch
      %92 = sbr.rel (0) target = $region61
    $region60: #{radar_feature_extractor.1} parent=1 // pred_region
      %93 = dma.done [#allocation9], 1024
    $region61: #{radar_feature_extractor.1} parent=1 // pred_fallthru
      _
    %v95 = vld [vmem:[%s0] sm:$0xff]
    %v96 = vld [vmem:[%s0 + $0x8] sm:$0xff]
    %v97 = vld [vmem:[%s1] sm:$0xff]
    %v98 = vld [vmem:[%s2] sm:$0x1]
    %100 = vset.pattern.permute.xlu0 0
    %101 = vperm.xlu0 %100, %v95
    %v102 = vpop.permute.xlu0 %101
    %105 = vset.pattern.permute.xlu0 0
    %106 = vperm.xlu0 %105, %v96
    %v107 = vpop.permute.xlu0 %106
    %v109 = vlaneseq
    %v110 = vshrl.u32 %v109, 7
    %v111 = vsub.s32 0, %v110
    %v112 = vrot.slane %v97, %v111
    %v113 = vmul.f32 %v102, %v112
    %v114 = vmul.f32 %v107, %v112
    %v116 = vlaneseq
    %v117 = vshrl.u32 %v116, 7
    %v118 = vsub.s32 0, %v117
    %v119 = vrot.slane %v98, %v118
    %v121 = vadd.f32 %v119, %v113
    %v122 = vadd.f32 %v119, %v114
    %123 = vset.pattern.permute.xlu0 1
    %124 = vperm.xlu0 %123, %v95
    %v125 = vpop.permute.xlu0 %124
    %127 = vset.pattern.permute.xlu0 1
    %128 = vperm.xlu0 %127, %v96
    %v129 = vpop.permute.xlu0 %128
    %v131 = vlaneseq
    %v132 = vshrl.u32 %v131, 7
    %v133 = vsub.s32 1, %v132
    %v134 = vrot.slane %v97, %v133
    %v135 = vmul.f32 %v125, %v134
    %v136 = vmul.f32 %v129, %v134
    %v137 = vadd.f32 %v121, %v135
    %v138 = vadd.f32 %v122, %v136
    %139 = vset.pattern.permute.xlu0 2
    %140 = vperm.xlu0 %139, %v95
    %v141 = vpop.permute.xlu0 %140
    %143 = vset.pattern.permute.xlu0 2
    %144 = vperm.xlu0 %143, %v96
    %v145 = vpop.permute.xlu0 %144
    %v147 = vlaneseq
    %v148 = vshrl.u32 %v147, 7
    %v149 = vsub.s32 2, %v148
    %v150 = vrot.slane %v97, %v149
    %v151 = vmul.f32 %v141, %v150
    %v152 = vmul.f32 %v145, %v150
    %v153 = vadd.f32 %v137, %v151
    %v154 = vadd.f32 %v138, %v152
    %155 = vset.pattern.permute.xlu0 3
    %156 = vperm.xlu0 %155, %v95
    %v157 = vpop.permute.xlu0 %156
    %159 = vset.pattern.permute.xlu0 3
    %160 = vperm.xlu0 %159, %v96
    %v161 = vpop.permute.xlu0 %160
    %v163 = vlaneseq
    %v164 = vshrl.u32 %v163, 7
    %v165 = vsub.s32 3, %v164
    %v166 = vrot.slane %v97, %v165
    %v167 = vmul.f32 %v157, %v166
    %v168 = vmul.f32 %v161, %v166
    %v169 = vadd.f32 %v153, %v167
    %v170 = vadd.f32 %v154, %v168
    %171 = vset.pattern.permute.xlu0 4
    %172 = vperm.xlu0 %171, %v95
    %v173 = vpop.permute.xlu0 %172
    %175 = vset.pattern.permute.xlu0 4
    %176 = vperm.xlu0 %175, %v96
    %v177 = vpop.permute.xlu0 %176
    %v179 = vlaneseq
    %v180 = vshrl.u32 %v179, 7
    %v181 = vsub.s32 4, %v180
    %v182 = vrot.slane %v97, %v181
    %v183 = vmul.f32 %v173, %v182
    %v184 = vmul.f32 %v177, %v182
    %v185 = vadd.f32 %v169, %v183
    %v186 = vadd.f32 %v170, %v184
    %187 = vset.pattern.permute.xlu0 5
    %188 = vperm.xlu0 %187, %v95
    %v189 = vpop.permute.xlu0 %188
    %191 = vset.pattern.permute.xlu0 5
    %192 = vperm.xlu0 %191, %v96
    %v193 = vpop.permute.xlu0 %192
    %v195 = vlaneseq
    %v196 = vshrl.u32 %v195, 7
    %v197 = vsub.s32 5, %v196
    %v198 = vrot.slane %v97, %v197
    %v199 = vmul.f32 %v189, %v198
    %v200 = vmul.f32 %v193, %v198
    %v201 = vadd.f32 %v185, %v199
    %v202 = vadd.f32 %v186, %v200
    %203 = vset.pattern.permute.xlu0 6
    %204 = vperm.xlu0 %203, %v95
    %v205 = vpop.permute.xlu0 %204
    %207 = vset.pattern.permute.xlu0 6
    %208 = vperm.xlu0 %207, %v96
    %v209 = vpop.permute.xlu0 %208
    %v211 = vlaneseq
    %v212 = vshrl.u32 %v211, 7
    %v213 = vsub.s32 6, %v212
    %v214 = vrot.slane %v97, %v213
    %v215 = vmul.f32 %v205, %v214
    %v216 = vmul.f32 %v209, %v214
    %v217 = vadd.f32 %v201, %v215
    %v218 = vadd.f32 %v202, %v216
    %219 = vset.pattern.permute.xlu0 7
    %220 = vperm.xlu0 %219, %v95
    %v221 = vpop.permute.xlu0 %220
    %223 = vset.pattern.permute.xlu0 7
    %224 = vperm.xlu0 %223, %v96
    %v225 = vpop.permute.xlu0 %224
    %v227 = vlaneseq
    %v228 = vshrl.u32 %v227, 7
    %v229 = vsub.s32 7, %v228
    %v230 = vrot.slane %v97, %v229
    %v231 = vmul.f32 %v221, %v230
    %v232 = vmul.f32 %v225, %v230
    %v233 = vadd.f32 %v217, %v231
    %v234 = vadd.f32 %v218, %v232
    %v235 = vmax.f32 %v233, 0.0
    %v236 = vmax.f32 %v234, 0.0
    %v237 = vpack.c.bf16 %v236, %v235
    %v238 = vld [vmem:[#allocation2] sm:$0xf]
    %v239 = vld [vmem:[#allocation2 + $0x4] sm:$0xf]
    %v240 = vld [vmem:[#allocation2 + $0x8] sm:$0xf]
    %v241 = vld [vmem:[#allocation2 + $0xc] sm:$0xf]
    %v242 = vld [vmem:[#allocation2 + $0x10] sm:$0xf]
    %v243 = vld [vmem:[#allocation2 + $0x14] sm:$0xf]
    %v244 = vld [vmem:[#allocation2 + $0x18] sm:$0xf]
    %v245 = vld [vmem:[#allocation2 + $0x1c] sm:$0xf]
    %v246 = vld [vmem:[#allocation2 + $0x20] sm:$0xf]
    %v247 = vld [vmem:[#allocation2 + $0x24] sm:$0xf]
    %v248 = vld [vmem:[#allocation2 + $0x28] sm:$0xf]
    %v249 = vld [vmem:[#allocation2 + $0x2c] sm:$0xf]
    %v250 = vld [vmem:[#allocation2 + $0x30] sm:$0xf]
    %v251 = vld [vmem:[#allocation2 + $0x34] sm:$0xf]
    %v252 = vld [vmem:[#allocation2 + $0x38] sm:$0xf]
    %v253 = vld [vmem:[#allocation2 + $0x3c] sm:$0xf]
    %v254 = vld [vmem:[%s4] sm:$0x1]
    %v256 = vlaneseq
    %v257 = vshrl.u32 %v256, 7
    %v258 = vsub.s32 0, %v257
    %v259 = vrot.slane %v254, %v258
    %v277 = vunpack.c.l.b16 %v238
    %v278 = vunpack.c.l.b16 %v239
    %v279 = vunpack.c.l.b16 %v240
    %v280 = vunpack.c.l.b16 %v241
    %v281 = vunpack.c.l.b16 %v242
    %v282 = vunpack.c.l.b16 %v243
    %v283 = vunpack.c.l.b16 %v244
    %v284 = vunpack.c.l.b16 %v245
    %v285 = vunpack.c.l.b16 %v246
    %v286 = vunpack.c.l.b16 %v247
    %v287 = vunpack.c.l.b16 %v248
    %v288 = vunpack.c.l.b16 %v249
    %v289 = vunpack.c.l.b16 %v250
    %v290 = vunpack.c.l.b16 %v251
    %v291 = vunpack.c.l.b16 %v252
    %v292 = vunpack.c.l.b16 %v253
    %v293 = vpack.c.b16 %v278, %v277
    %v294 = vpack.c.b16 %v280, %v279
    %v295 = vpack.c.b16 %v282, %v281
    %v296 = vpack.c.b16 %v284, %v283
    %v297 = vpack.c.b16 %v286, %v285
    %v298 = vpack.c.b16 %v288, %v287
    %v299 = vpack.c.b16 %v290, %v289
    %v300 = vpack.c.b16 %v292, %v291
    %309 = vmatprep.subr.bf16.mxu0 0
    %310 = vmatpush1.bf16.msra.mxu0 %v300
    %311 = vmatprep.subr.bf16.mxu0 0
    %312 = vmatpush1.bf16.msra.mxu0 %v299
    %313 = vmatprep.subr.bf16.mxu0 0
    %314 = vmatpush1.bf16.msra.mxu0 %v298
    %315 = vmatprep.subr.bf16.mxu0 0
    %316 = vmatpush1.bf16.msra.mxu0 %v297
    %317 = vmatprep.subr.bf16.mxu0 0
    %318 = vmatpush1.bf16.msra.mxu0 %v296
    %319 = vmatprep.subr.bf16.mxu0 0
    %320 = vmatpush1.bf16.msra.mxu0 %v295
    %321 = vmatprep.subr.bf16.mxu0 0
    %322 = vmatpush1.bf16.msra.mxu0 %v294
    %323 = vmatprep.subr.bf16.mxu0 0
    %324 = vmatpush1.bf16.msra.mxu0 %v293
    %325 = vmatprep.subr.bf16.mxu0 0
    %326 = vmatpush2.bf16.msra.mxu0 0
    %327 = vmatprep.subr.bf16.mxu0 0
    %328 = vmatpush2.bf16.msra.mxu0 0
    %329 = vmatprep.subr.bf16.mxu0 0
    %330 = vmatpush2.bf16.msra.mxu0 0
    %331 = vmatprep.subr.bf16.mxu0 0
    %332 = vmatpush2.bf16.msra.mxu0 0
    %333 = vmatprep.subr.bf16.mxu0 0
    %334 = vmatpush2.bf16.msra.mxu0 0
    %335 = vmatprep.subr.bf16.mxu0 0
    %336 = vmatpush2.bf16.msra.mxu0 0
    %337 = vmatprep.subr.bf16.mxu0 0
    %338 = vmatpush2.bf16.msra.mxu0 0
    %339 = vmatprep.subr.bf16.mxu0 0
    %340 = vmatpush2.bf16.msra.mxu0 0
    %341 = vmatprep.mubr.bf16.mxu0 0
    %342 = vmatmul.mubr.bf16.gmra.mxu0 %v237
    %v343 = vpop.f32.mrf.mxu0
    %v344 = vadd.f32 %v259, %v343
    %v345 = vpop.f32.mrf.mxu0
    %v346 = vpop.f32.mrf.mxu0
    %v347 = vadd.f32 %v259, %v346
    %v348 = vpop.f32.mrf.mxu0
    %349 = vdwg.mxu0
    %v350 = vmax.f32 %v344, 0.0
    %v351 = vmax.f32 %v347, 0.0
    %v352 = vpack.c.bf16 %v351, %v350
    %v353 = vld [vmem:[#allocation5] sm:$0xff]
    %v354 = vld [vmem:[#allocation5 + $0x8] sm:$0xff]
    %v355 = vld [vmem:[#allocation5 + $0x10] sm:$0xff]
    %v356 = vld [vmem:[#allocation5 + $0x18] sm:$0xff]
    %v357 = vld [vmem:[#allocation5 + $0x20] sm:$0xff]
    %v358 = vld [vmem:[#allocation5 + $0x28] sm:$0xff]
    %v359 = vld [vmem:[#allocation5 + $0x30] sm:$0xff]
    %v360 = vld [vmem:[#allocation5 + $0x38] sm:$0xff]
    %v361 = vld [vmem:[#allocation5 + $0x40] sm:$0xff]
    %v362 = vld [vmem:[#allocation5 + $0x48] sm:$0xff]
    %v363 = vld [vmem:[#allocation5 + $0x50] sm:$0xff]
    %v364 = vld [vmem:[#allocation5 + $0x58] sm:$0xff]
    %v365 = vld [vmem:[#allocation5 + $0x60] sm:$0xff]
    %v366 = vld [vmem:[#allocation5 + $0x68] sm:$0xff]
    %v367 = vld [vmem:[#allocation5 + $0x70] sm:$0xff]
    %v368 = vld [vmem:[#allocation5 + $0x78] sm:$0xff]
    %v369 = vld [vmem:[%s6] sm:$0x3]
    %v371 = vlaneseq
    %v372 = vshrl.u32 %v371, 7
    %v373 = vsub.s32 0, %v372
    %v374 = vrot.slane %v369, %v373
    %v375 = vlaneseq
    %v376 = vshrl.u32 %v375, 7
    %v377 = vsub.s32 1, %v376
    %v378 = vrot.slane %v369, %v377
    %v397 = vunpack.c.l.b16 %v353
    %v398 = vunpack.c.h.b16 %v353
    %v399 = vunpack.c.l.b16 %v354
    %v400 = vunpack.c.h.b16 %v354
    %v401 = vunpack.c.l.b16 %v355
    %v402 = vunpack.c.h.b16 %v355
    %v403 = vunpack.c.l.b16 %v356
    %v404 = vunpack.c.h.b16 %v356
    %v405 = vunpack.c.l.b16 %v357
    %v406 = vunpack.c.h.b16 %v357
    %v407 = vunpack.c.l.b16 %v358
    %v408 = vunpack.c.h.b16 %v358
    %v409 = vunpack.c.l.b16 %v359
    %v410 = vunpack.c.h.b16 %v359
    %v411 = vunpack.c.l.b16 %v360
    %v412 = vunpack.c.h.b16 %v360
    %v413 = vunpack.c.l.b16 %v361
    %v414 = vunpack.c.h.b16 %v361
    %v415 = vunpack.c.l.b16 %v362
    %v416 = vunpack.c.h.b16 %v362
    %v417 = vunpack.c.l.b16 %v363
    %v418 = vunpack.c.h.b16 %v363
    %v419 = vunpack.c.l.b16 %v364
    %v420 = vunpack.c.h.b16 %v364
    %v421 = vunpack.c.l.b16 %v365
    %v422 = vunpack.c.h.b16 %v365
    %v423 = vunpack.c.l.b16 %v366
    %v424 = vunpack.c.h.b16 %v366
    %v425 = vunpack.c.l.b16 %v367
    %v426 = vunpack.c.h.b16 %v367
    %v427 = vunpack.c.l.b16 %v368
    %v428 = vunpack.c.h.b16 %v368
    %v429 = vpack.c.b16 %v399, %v397
    %v430 = vpack.c.b16 %v400, %v398
    %v431 = vpack.c.b16 %v403, %v401
    %v432 = vpack.c.b16 %v404, %v402
    %v433 = vpack.c.b16 %v407, %v405
    %v434 = vpack.c.b16 %v408, %v406
    %v435 = vpack.c.b16 %v411, %v409
    %v436 = vpack.c.b16 %v412, %v410
    %v437 = vpack.c.b16 %v415, %v413
    %v438 = vpack.c.b16 %v416, %v414
    %v439 = vpack.c.b16 %v419, %v417
    %v440 = vpack.c.b16 %v420, %v418
    %v441 = vpack.c.b16 %v423, %v421
    %v442 = vpack.c.b16 %v424, %v422
    %v443 = vpack.c.b16 %v427, %v425
    %v444 = vpack.c.b16 %v428, %v426
    %461 = vmatprep.subr.bf16.mxu0 %v444
    %462 = vmatpush1.bf16.msra.mxu0 %v443
    %463 = vmatprep.subr.bf16.mxu0 %v442
    %464 = vmatpush1.bf16.msra.mxu0 %v441
    %465 = vmatprep.subr.bf16.mxu0 %v440
    %466 = vmatpush1.bf16.msra.mxu0 %v439
    %467 = vmatprep.subr.bf16.mxu0 %v438
    %468 = vmatpush1.bf16.msra.mxu0 %v437
    %469 = vmatprep.subr.bf16.mxu0 %v436
    %470 = vmatpush1.bf16.msra.mxu0 %v435
    %471 = vmatprep.subr.bf16.mxu0 %v434
    %472 = vmatpush1.bf16.msra.mxu0 %v433
    %473 = vmatprep.subr.bf16.mxu0 %v432
    %474 = vmatpush1.bf16.msra.mxu0 %v431
    %475 = vmatprep.subr.bf16.mxu0 %v430
    %476 = vmatpush1.bf16.msra.mxu0 %v429
    %477 = vmatprep.subr.bf16.mxu0 0
    %478 = vmatpush2.bf16.msra.mxu0 0
    %479 = vmatprep.subr.bf16.mxu0 0
    %480 = vmatpush2.bf16.msra.mxu0 0
    %481 = vmatprep.subr.bf16.mxu0 0
    %482 = vmatpush2.bf16.msra.mxu0 0
    %483 = vmatprep.subr.bf16.mxu0 0
    %484 = vmatpush2.bf16.msra.mxu0 0
    %485 = vmatprep.subr.bf16.mxu0 0
    %486 = vmatpush2.bf16.msra.mxu0 0
    %487 = vmatprep.subr.bf16.mxu0 0
    %488 = vmatpush2.bf16.msra.mxu0 0
    %489 = vmatprep.subr.bf16.mxu0 0
    %490 = vmatpush2.bf16.msra.mxu0 0
    %491 = vmatprep.subr.bf16.mxu0 0
    %492 = vmatpush2.bf16.msra.mxu0 0
    %493 = vmatprep.mubr.bf16.mxu0 0
    %494 = vmatmul.mubr.bf16.gmra.mxu0 %v352
    %v495 = vpop.f32.mrf.mxu0
    %v496 = vadd.f32 %v374, %v495
    %v497 = vpop.f32.mrf.mxu0
    %v498 = vadd.f32 %v378, %v497
    %v499 = vpop.f32.mrf.mxu0
    %v500 = vadd.f32 %v374, %v499
    %v501 = vpop.f32.mrf.mxu0
    %v502 = vadd.f32 %v378, %v501
    %503 = vdwg.mxu0
    %v504 = vmax.f32 %v496, 0.0
    %v505 = vmax.f32 %v498, 0.0
    %v506 = vmax.f32 %v500, 0.0
    %v507 = vmax.f32 %v502, 0.0
    %v508 = vpack.c.bf16 %v506, %v504
    %v509 = vpack.c.bf16 %v507, %v505
    %v510 = vld [vmem:[#allocation7] sm:$0xf]
    %v511 = vld [vmem:[#allocation7 + $0x4] sm:$0xf]
    %v512 = vld [vmem:[#allocation7 + $0x8] sm:$0xf]
    %v513 = vld [vmem:[#allocation7 + $0xc] sm:$0xf]
    %v514 = vld [vmem:[#allocation7 + $0x10] sm:$0xf]
    %v515 = vld [vmem:[#allocation7 + $0x14] sm:$0xf]
    %v516 = vld [vmem:[#allocation7 + $0x18] sm:$0xf]
    %v517 = vld [vmem:[#allocation7 + $0x1c] sm:$0xf]
    %v518 = vld [vmem:[#allocation7 + $0x20] sm:$0xf]
    %v519 = vld [vmem:[#allocation7 + $0x24] sm:$0xf]
    %v520 = vld [vmem:[#allocation7 + $0x28] sm:$0xf]
    %v521 = vld [vmem:[#allocation7 + $0x2c] sm:$0xf]
    %v522 = vld [vmem:[#allocation7 + $0x30] sm:$0xf]
    %v523 = vld [vmem:[#allocation7 + $0x34] sm:$0xf]
    %v524 = vld [vmem:[#allocation7 + $0x38] sm:$0xf]
    %v525 = vld [vmem:[#allocation7 + $0x3c] sm:$0xf]
    %v526 = vld [vmem:[#allocation7 + $0x40] sm:$0xf]
    %v527 = vld [vmem:[#allocation7 + $0x44] sm:$0xf]
    %v528 = vld [vmem:[#allocation7 + $0x48] sm:$0xf]
    %v529 = vld [vmem:[#allocation7 + $0x4c] sm:$0xf]
    %v530 = vld [vmem:[#allocation7 + $0x50] sm:$0xf]
    %v531 = vld [vmem:[#allocation7 + $0x54] sm:$0xf]
    %v532 = vld [vmem:[#allocation7 + $0x58] sm:$0xf]
    %v533 = vld [vmem:[#allocation7 + $0x5c] sm:$0xf]
    %v534 = vld [vmem:[#allocation7 + $0x60] sm:$0xf]
    %v535 = vld [vmem:[#allocation7 + $0x64] sm:$0xf]
    %v536 = vld [vmem:[#allocation7 + $0x68] sm:$0xf]
    %v537 = vld [vmem:[#allocation7 + $0x6c] sm:$0xf]
    %v538 = vld [vmem:[#allocation7 + $0x70] sm:$0xf]
    %v539 = vld [vmem:[#allocation7 + $0x74] sm:$0xf]
    %v540 = vld [vmem:[#allocation7 + $0x78] sm:$0xf]
    %v541 = vld [vmem:[#allocation7 + $0x7c] sm:$0xf]
    %v542 = vld [vmem:[%s8] sm:$0x1]
    %v544 = vlaneseq
    %v545 = vshrl.u32 %v544, 7
    %v546 = vsub.s32 0, %v545
    %v547 = vrot.slane %v542, %v546
    %v581 = vunpack.c.l.b16 %v510
    %v582 = vunpack.c.l.b16 %v511
    %v583 = vunpack.c.l.b16 %v512
    %v584 = vunpack.c.l.b16 %v513
    %v585 = vunpack.c.l.b16 %v514
    %v586 = vunpack.c.l.b16 %v515
    %v587 = vunpack.c.l.b16 %v516
    %v588 = vunpack.c.l.b16 %v517
    %v589 = vunpack.c.l.b16 %v518
    %v590 = vunpack.c.l.b16 %v519
    %v591 = vunpack.c.l.b16 %v520
    %v592 = vunpack.c.l.b16 %v521
    %v593 = vunpack.c.l.b16 %v522
    %v594 = vunpack.c.l.b16 %v523
    %v595 = vunpack.c.l.b16 %v524
    %v596 = vunpack.c.l.b16 %v525
    %v597 = vunpack.c.l.b16 %v526
    %v598 = vunpack.c.l.b16 %v527
    %v599 = vunpack.c.l.b16 %v528
    %v600 = vunpack.c.l.b16 %v529
    %v601 = vunpack.c.l.b16 %v530
    %v602 = vunpack.c.l.b16 %v531
    %v603 = vunpack.c.l.b16 %v532
    %v604 = vunpack.c.l.b16 %v533
    %v605 = vunpack.c.l.b16 %v534
    %v606 = vunpack.c.l.b16 %v535
    %v607 = vunpack.c.l.b16 %v536
    %v608 = vunpack.c.l.b16 %v537
    %v609 = vunpack.c.l.b16 %v538
    %v610 = vunpack.c.l.b16 %v539
    %v611 = vunpack.c.l.b16 %v540
    %v612 = vunpack.c.l.b16 %v541
    %v613 = vpack.c.b16 %v582, %v581
    %v614 = vpack.c.b16 %v584, %v583
    %v615 = vpack.c.b16 %v586, %v585
    %v616 = vpack.c.b16 %v588, %v587
    %v617 = vpack.c.b16 %v590, %v589
    %v618 = vpack.c.b16 %v592, %v591
    %v619 = vpack.c.b16 %v594, %v593
    %v620 = vpack.c.b16 %v596, %v595
    %v621 = vpack.c.b16 %v598, %v597
    %v622 = vpack.c.b16 %v600, %v599
    %v623 = vpack.c.b16 %v602, %v601
    %v624 = vpack.c.b16 %v604, %v603
    %v625 = vpack.c.b16 %v606, %v605
    %v626 = vpack.c.b16 %v608, %v607
    %v627 = vpack.c.b16 %v610, %v609
    %v628 = vpack.c.b16 %v612, %v611
    %645 = vmatprep.subr.bf16.mxu0 0
    %646 = vmatpush1.bf16.msra.mxu0 %v620
    %647 = vmatprep.subr.bf16.mxu0 0
    %648 = vmatpush1.bf16.msra.mxu0 %v619
    %649 = vmatprep.subr.bf16.mxu0 0
    %650 = vmatpush1.bf16.msra.mxu0 %v618
    %651 = vmatprep.subr.bf16.mxu0 0
    %652 = vmatpush1.bf16.msra.mxu0 %v617
    %653 = vmatprep.subr.bf16.mxu0 0
    %654 = vmatpush1.bf16.msra.mxu0 %v616
    %655 = vmatprep.subr.bf16.mxu0 0
    %656 = vmatpush1.bf16.msra.mxu0 %v615
    %657 = vmatprep.subr.bf16.mxu0 0
    %658 = vmatpush1.bf16.msra.mxu0 %v614
    %659 = vmatprep.subr.bf16.mxu0 0
    %660 = vmatpush1.bf16.msra.mxu0 %v613
    %661 = vmatprep.subr.bf16.mxu0 0
    %662 = vmatpush2.bf16.msra.mxu0 %v628
    %663 = vmatprep.subr.bf16.mxu0 0
    %664 = vmatpush2.bf16.msra.mxu0 %v627
    %665 = vmatprep.subr.bf16.mxu0 0
    %666 = vmatpush2.bf16.msra.mxu0 %v626
    %667 = vmatprep.subr.bf16.mxu0 0
    %668 = vmatpush2.bf16.msra.mxu0 %v625
    %669 = vmatprep.subr.bf16.mxu0 0
    %670 = vmatpush2.bf16.msra.mxu0 %v624
    %671 = vmatprep.subr.bf16.mxu0 0
    %672 = vmatpush2.bf16.msra.mxu0 %v623
    %673 = vmatprep.subr.bf16.mxu0 0
    %674 = vmatpush2.bf16.msra.mxu0 %v622
    %675 = vmatprep.subr.bf16.mxu0 0
    %676 = vmatpush2.bf16.msra.mxu0 %v621
    %677 = vmatprep.mubr.bf16.mxu0 %v509
    %678 = vmatmul.mubr.bf16.gmra.mxu0 %v508
    %v679 = vpop.f32.mrf.mxu0
    %v680 = vadd.f32 %v547, %v679
    %v681 = vpop.f32.mrf.mxu0
    %v682 = vpop.f32.mrf.mxu0
    %v683 = vadd.f32 %v547, %v682
    %v684 = vpop.f32.mrf.mxu0
    %685 = vdwg.mxu0
    %v686 = vmax.f32 %v680, 0.0
    %v687 = vmax.f32 %v683, 0.0
    %v688 = vpack.c.bf16 %v687, %v686
    %v689 = vld [vmem:[#allocation8] sm:$0xf]
    %v690 = vld [vmem:[#allocation8 + $0x4] sm:$0xf]
    %v691 = vld [vmem:[#allocation8 + $0x8] sm:$0xf]
    %v692 = vld [vmem:[#allocation8 + $0xc] sm:$0xf]
    %v693 = vld [vmem:[#allocation8 + $0x10] sm:$0xf]
    %v694 = vld [vmem:[#allocation8 + $0x14] sm:$0xf]
    %v695 = vld [vmem:[#allocation8 + $0x18] sm:$0xf]
    %v696 = vld [vmem:[#allocation8 + $0x1c] sm:$0xf]
    %v697 = vld [vmem:[#allocation8 + $0x20] sm:$0xf]
    %v698 = vld [vmem:[#allocation8 + $0x24] sm:$0xf]
    %v699 = vld [vmem:[#allocation8 + $0x28] sm:$0xf]
    %v700 = vld [vmem:[#allocation8 + $0x2c] sm:$0xf]
    %v701 = vld [vmem:[#allocation8 + $0x30] sm:$0xf]
    %v702 = vld [vmem:[#allocation8 + $0x34] sm:$0xf]
    %v703 = vld [vmem:[#allocation8 + $0x38] sm:$0xf]
    %v704 = vld [vmem:[#allocation8 + $0x3c] sm:$0xf]
    %v705 = vld [vmem:[%s10] sm:$0x1]
    %v707 = vlaneseq
    %v708 = vshrl.u32 %v707, 7
    %v709 = vsub.s32 0, %v708
    %v710 = vrot.slane %v705, %v709
    %v728 = vunpack.c.l.b16 %v689
    %v729 = vunpack.c.l.b16 %v690
    %v730 = vunpack.c.l.b16 %v691
    %v731 = vunpack.c.l.b16 %v692
    %v732 = vunpack.c.l.b16 %v693
    %v733 = vunpack.c.l.b16 %v694
    %v734 = vunpack.c.l.b16 %v695
    %v735 = vunpack.c.l.b16 %v696
    %v736 = vunpack.c.l.b16 %v697
    %v737 = vunpack.c.l.b16 %v698
    %v738 = vunpack.c.l.b16 %v699
    %v739 = vunpack.c.l.b16 %v700
    %v740 = vunpack.c.l.b16 %v701
    %v741 = vunpack.c.l.b16 %v702
    %v742 = vunpack.c.l.b16 %v703
    %v743 = vunpack.c.l.b16 %v704
    %v744 = vpack.c.b16 %v729, %v728
    %v745 = vpack.c.b16 %v731, %v730
    %v746 = vpack.c.b16 %v733, %v732
    %v747 = vpack.c.b16 %v735, %v734
    %v748 = vpack.c.b16 %v737, %v736
    %v749 = vpack.c.b16 %v739, %v738
    %v750 = vpack.c.b16 %v741, %v740
    %v751 = vpack.c.b16 %v743, %v742
    %760 = vmatprep.subr.bf16.mxu0 0
    %761 = vmatpush1.bf16.msra.mxu0 %v751
    %762 = vmatprep.subr.bf16.mxu0 0
    %763 = vmatpush1.bf16.msra.mxu0 %v750
    %764 = vmatprep.subr.bf16.mxu0 0
    %765 = vmatpush1.bf16.msra.mxu0 %v749
    %766 = vmatprep.subr.bf16.mxu0 0
    %767 = vmatpush1.bf16.msra.mxu0 %v748
    %768 = vmatprep.subr.bf16.mxu0 0
    %769 = vmatpush1.bf16.msra.mxu0 %v747
    %770 = vmatprep.subr.bf16.mxu0 0
    %771 = vmatpush1.bf16.msra.mxu0 %v746
    %772 = vmatprep.subr.bf16.mxu0 0
    %773 = vmatpush1.bf16.msra.mxu0 %v745
    %774 = vmatprep.subr.bf16.mxu0 0
    %775 = vmatpush1.bf16.msra.mxu0 %v744
    %776 = vmatprep.subr.bf16.mxu0 0
    %777 = vmatpush2.bf16.msra.mxu0 0
    %778 = vmatprep.subr.bf16.mxu0 0
    %779 = vmatpush2.bf16.msra.mxu0 0
    %780 = vmatprep.subr.bf16.mxu0 0
    %781 = vmatpush2.bf16.msra.mxu0 0
    %782 = vmatprep.subr.bf16.mxu0 0
    %783 = vmatpush2.bf16.msra.mxu0 0
    %784 = vmatprep.subr.bf16.mxu0 0
    %785 = vmatpush2.bf16.msra.mxu0 0
    %786 = vmatprep.subr.bf16.mxu0 0
    %787 = vmatpush2.bf16.msra.mxu0 0
    %788 = vmatprep.subr.bf16.mxu0 0
    %789 = vmatpush2.bf16.msra.mxu0 0
    %790 = vmatprep.subr.bf16.mxu0 0
    %791 = vmatpush2.bf16.msra.mxu0 0
    %792 = vmatprep.mubr.bf16.mxu0 0
    %793 = vmatmul.mubr.bf16.gmra.mxu0 %v688
    %v794 = vpop.f32.mrf.mxu0
    %v795 = vadd.f32 %v710, %v794
    %v796 = vpop.f32.mrf.mxu0
    %v797 = vpop.f32.mrf.mxu0
    %v798 = vadd.f32 %v710, %v797
    %v799 = vpop.f32.mrf.mxu0
    %800 = vdwg.mxu0
    %v801 = vmul.f32 %v795, %v795
    %v802 = vmul.f32 %v798, %v798
    %803 = vadd.xlane.f32.xlu0 %v801
    %v804 = vpop.xlane.xlu0 %803
    %805 = vadd.xlane.f32.xlu0 %v802
    %v806 = vpop.xlane.xlu0 %805
    %v807 = vmax.f32 %v804, 1e-24
    %v808 = vmax.f32 %v806, 1e-24
    %v809 = vrsqrt.pop %v807
    %v810 = vrsqrt.pop %v808
    %v811 = vmul.f32 %v795, %v809
    %v812 = vmul.f32 %v798, %v810
    %813 = vst [vmem:[#allocation10] sm:$0xff] %v811
    %814 = vst [vmem:[#allocation10 + $0x8] sm:$0xff] %v812
    // Predicated region
    $region62: #{radar_feature_extractor.1} parent=1 // pred_check
      _
    $region63: #{radar_feature_extractor.1} parent=1 // pred_check_branch
      %816 = sbr.rel (0) target = $region65
    $region64: #{radar_feature_extractor.1} parent=1 // pred_region
      %s818 = ssub.s32 256, 256
      %819 = vsyncadd [#allocation4], %s818
      %s820 = sshll.u32 [#allocation10], 4
      %s821 = int_to_ptr.vmem [resolvable:$true] %s820
      %826 = dma.vmem_to_hbm [thread:$0]  %s821, 256, %s11, [#allocation4], 128, 128, 8
    $region65: #{radar_feature_extractor.1} parent=1 // pred_fallthru
      _
    // Predicated region
    $region66: #{radar_feature_extractor.1} parent=1 // pred_check
      _
    $region67: #{radar_feature_extractor.1} parent=1 // pred_check_branch
      %828 = sbr.rel (0) target = $region69
    $region68: #{radar_feature_extractor.1} parent=1 // pred_region
      %829 = dma.done [#allocation4], 256
    $region69: #{radar_feature_extractor.1} parent=1 // pred_fallthru
      _
    %830 = vsyncpa [#allocation3], 1
    %831 = vsyncpa [#allocation6], 1
    %832 = vsyncpa [#allocation9], 1
    %833 = vsyncpa [#allocation4], 1

</llo_original>
